<compile_context>
chip_gen: v7x
topology: tpu7x:2x2x1
jax: 0.10.0
libtpu: 0.0.40
codegen_flags: <defaults>
</compile_context>

<pallas_src>
import jax
import jax.numpy as jnp
import numpy as np
from jax.experimental import pallas as pl
from jax.experimental.pallas import tpu as pltpu

N1 = 512
N2 = 256
BN_EPS = 1e-5


def actor_kernel(x_ref, w1_ref, b1_ref, gamma_ref, beta_ref,
                 w2_ref, b2_ref, w3_ref, b3_ref, o_ref):
    # fc1 (+ dropout(p=0.0) identity) + relu — bf16 operands, f32 accumulate.
    h1 = jnp.dot(x_ref[...].astype(jnp.bfloat16), w1_ref[...],
                 preferred_element_type=jnp.float32) + b1_ref[...]
    h1 = jnp.maximum(h1, 0.0)

    # BatchNorm1d over the batch axis (training-mode batch statistics, biased
    # variance, eps=1e-5). Centered two-pass variance in f32 (numerically
    # safe), folded into a single scale FMA.
    mean = jnp.mean(h1, axis=0, keepdims=True)
    d = h1 - mean
    var = jnp.mean(d * d, axis=0, keepdims=True)
    scale = gamma_ref[...] * jax.lax.rsqrt(var + BN_EPS)
    h1 = d * scale + beta_ref[...]

    # fc2 (+ dropout(p=0.0) identity) + relu.
    h2 = jnp.dot(h1.astype(jnp.bfloat16), w2_ref[...],
                 preferred_element_type=jnp.float32) + b2_ref[...]
    h2 = jnp.maximum(h2, 0.0)

    # fc3 + tanh. Padded output columns see zero weights/bias -> tanh(0)=0.
    out = jnp.dot(h2.astype(jnp.bfloat16), w3_ref[...],
                  preferred_element_type=jnp.float32) + b3_ref[...]
    o_ref[...] = jnp.tanh(out)


def actor_forward(state, params):
    """state: [B, state_size] float32. params: dict from init_actor_params."""
    B, S = state.shape
    A = int(params["action_size"])
    A_pad = params["w3"].shape[1]          # already lane-dense padded at init

    args = (state, params["w1"], params["b1"], params["gamma"], params["beta"],
            params["w2"], params["b2"], params["w3"], params["b3"])

    # Advisory cost model for the XLA scheduler (bf16 weights = 2 B/elem).
    flops = 2 * B * (S * N1 + N1 * N2 + N2 * A_pad) + 10 * B * N1
    bytes_accessed = (4 * B * S                                   # state (f32)
                      + 2 * (S * N1 + N1 * N2 + N2 * A_pad)       # bf16 weights
                      + 4 * (3 * N1 + N2 + A_pad)                 # bias/BN rows
                      + 4 * B * A_pad)                            # output
    transcendentals = B * A_pad + N1                              # tanh + rsqrt

    vmem = pl.BlockSpec(memory_space=pltpu.MemorySpace.VMEM)
    out = pl.pallas_call(
        actor_kernel,
        out_shape=jax.ShapeDtypeStruct((B, A_pad), jnp.float32),
        in_specs=[vmem] * len(args),
        out_specs=vmem,
        cost_estimate=pl.CostEstimate(
            flops=int(flops),
            transcendentals=int(transcendentals),
            bytes_accessed=int(bytes_accessed)),
    )(*args)
    # Slice back to action_size to match the PyTorch module's output shape.
    # (Callers that tolerate padded columns can consume `out` directly.)
    return out[:, :A]


def init_actor_params(key, state_size, action_size):
    """Deterministic init mirroring the PyTorch module's reset_parameters().

    Note: hidden_init uses weight.size()[0] == out_features as 'fan_in'
    (a quirk of the original code) -> lim = 1/sqrt(out_features).
    Weights are stored transposed as [in, out] and pre-cast to bf16; w3/b3
    are pre-padded to a lane-dense multiple of 128 output columns.
    """
    k1, k2, k3, k4, k5, k6 = jax.random.split(key, 6)

    lim1 = 1.0 / np.sqrt(N1)
    lim2 = 1.0 / np.sqrt(N2)
    lim3 = 3e-3

    w1 = jax.random.uniform(k1, (state_size, N1), jnp.float32, -lim1, lim1)
    w2 = jax.random.uniform(k2, (N1, N2), jnp.float32, -lim2, lim2)
    w3 = jax.random.uniform(k3, (N2, action_size), jnp.float32, -lim3, lim3)

    # Linear biases keep PyTorch's default init: U(-1/sqrt(in), 1/sqrt(in)).
    b1 = jax.random.uniform(k4, (1, N1), jnp.float32,
                            -1.0 / np.sqrt(state_size), 1.0 / np.sqrt(state_size))
    b2 = jax.random.uniform(k5, (1, N2), jnp.float32,
                            -1.0 / np.sqrt(N1), 1.0 / np.sqrt(N1))
    b3 = jax.random.uniform(k6, (1, action_size), jnp.float32,
                            -1.0 / np.sqrt(N2), 1.0 / np.sqrt(N2))

    gamma = jnp.ones((1, N1), jnp.float32)
    beta = jnp.zeros((1, N1), jnp.float32)

    # Lane-dense padding of the output head (done once, not per call).
    A_pad = ((action_size + 127) // 128) * 128
    w3p = jnp.pad(w3, ((0, 0), (0, A_pad - action_size)))
    b3p = jnp.pad(b3, ((0, 0), (0, A_pad - action_size)))

    # TODO(synk): on v7x, w1/w2 could be fp8(e4m3) with per-column scales for
    # another 2x DMA reduction; kept bf16 here for portability (v5e/v6e).
    return dict(
        w1=w1.astype(jnp.bfloat16), b1=b1,
        w2=w2.astype(jnp.bfloat16), b2=b2,
        w3=w3p.astype(jnp.bfloat16), b3=b3p,
        gamma=gamma, beta=beta,
        action_size=action_size,
    )


def actor_forward_ref(state, p):
    """Pure-JAX f32 reference (bf16 weights cast up) for correctness check."""
    A = int(p["action_size"])
    h1 = jnp.maximum(state @ p["w1"].astype(jnp.float32) + p["b1"], 0.0)
    mean = jnp.mean(h1, axis=0, keepdims=True)
    var = jnp.mean((h1 - mean) ** 2, axis=0, keepdims=True)
    h1 = (h1 - mean) * jax.lax.rsqrt(var + BN_EPS) * p["gamma"] + p["beta"]
    h2 = jnp.maximum(h1 @ p["w2"].astype(jnp.float32) + p["b2"], 0.0)
    out = jnp.tanh(h2 @ p["w3"].astype(jnp.float32) + p["b3"])
    return out[:, :A]


if __name__ == "__main__":
    key = jax.random.PRNGKey(0)
    k_param, k_state = jax.random.split(key)

    batch = 8
    state_size = 32
    action_size = 4

    params = init_actor_params(k_param, state_size, action_size)
    state = jax.random.normal(k_state, (batch, state_size), jnp.float32)

    out = actor_forward(state, params)
    out = jax.block_until_ready(out)

    # Tolerance relaxed vs. the f32 reference because the kernel uses bf16
    # activation operands (f32 accumulation) at the MXU.
    ref = actor_forward_ref(state, params)
    np.testing.assert_allclose(np.asarray(out), np.asarray(ref),
                               atol=2e-2, rtol=2e-2)

    assert out.shape == (batch, action_size)
    print("KERNEL_OK")
</pallas_src>

<mosaic_0001>
module attributes {stable_mosaic.version = 11 : i64} {
  func.func @actor_kernel(%arg0: memref<8x32xf32, #tpu.memory_space<vmem>>, %arg1: memref<32x512xbf16, #tpu.memory_space<vmem>>, %arg2: memref<1x512xf32, #tpu.memory_space<vmem>>, %arg3: memref<1x512xf32, #tpu.memory_space<vmem>>, %arg4: memref<1x512xf32, #tpu.memory_space<vmem>>, %arg5: memref<512x256xbf16, #tpu.memory_space<vmem>>, %arg6: memref<1x256xf32, #tpu.memory_space<vmem>>, %arg7: memref<256x128xbf16, #tpu.memory_space<vmem>>, %arg8: memref<1x128xf32, #tpu.memory_space<vmem>>, %arg9: memref<8x128xf32, #tpu.memory_space<vmem>>) attributes {dimension_semantics = [], scalar_prefetch = 0 : i64, scratch_operands = 0 : i64, tpu.core_type = #tpu.core_type<tc>} {
    %c0 = arith.constant 0 : index
    %c0_0 = arith.constant 0 : index
    %0 = vector.load %arg0[%c0, %c0_0] : memref<8x32xf32, #tpu.memory_space<vmem>>, vector<8x32xf32>
    %1 = arith.truncf %0 : vector<8x32xf32> to vector<8x32xbf16>
    %c0_1 = arith.constant 0 : index
    %c0_2 = arith.constant 0 : index
    %2 = vector.load %arg1[%c0_1, %c0_2] : memref<32x512xbf16, #tpu.memory_space<vmem>>, vector<32x512xbf16>
    %cst = arith.constant dense<0.000000e+00> : vector<8x512xf32>
    %3 = tpu.matmul %1, %2, %cst {dimension_numbers = #tpu.dot_dimension_numbers<[1], [0], [0], [1], [0, 0, 1, 1], [], []>} : vector<8x32xbf16>, vector<32x512xbf16>, vector<8x512xf32> -> vector<8x512xf32>
    %c0_3 = arith.constant 0 : index
    %c0_4 = arith.constant 0 : index
    %4 = vector.load %arg2[%c0_3, %c0_4] : memref<1x512xf32, #tpu.memory_space<vmem>>, vector<1x512xf32>
    %5 = vector.broadcast %4 : vector<1x512xf32> to vector<8x512xf32>
    %6 = arith.addf %3, %5 : vector<8x512xf32>
    %cst_5 = arith.constant 0.000000e+00 : f32
    %7 = vector.broadcast %cst_5 : f32 to vector<8x512xf32>
    %8 = arith.maximumf %6, %7 : vector<8x512xf32>
    %cst_6 = arith.constant dense<0.000000e+00> : vector<512xf32>
    %9 = vector.multi_reduction <add>, %8, %cst_6 [0] : vector<8x512xf32> to vector<512xf32>
    %10 = vector.shape_cast %9 : vector<512xf32> to vector<1x512xf32>
    %cst_7 = arith.constant 8.000000e+00 : f32
    %11 = vector.broadcast %cst_7 : f32 to vector<1x512xf32>
    %12 = arith.divf %10, %11 : vector<1x512xf32>
    %13 = vector.broadcast %12 : vector<1x512xf32> to vector<8x512xf32>
    %14 = arith.subf %8, %13 : vector<8x512xf32>
    %15 = arith.mulf %14, %14 : vector<8x512xf32>
    %cst_8 = arith.constant dense<0.000000e+00> : vector<512xf32>
    %16 = vector.multi_reduction <add>, %15, %cst_8 [0] : vector<8x512xf32> to vector<512xf32>
    %17 = vector.shape_cast %16 : vector<512xf32> to vector<1x512xf32>
    %cst_9 = arith.constant 8.000000e+00 : f32
    %18 = vector.broadcast %cst_9 : f32 to vector<1x512xf32>
    %19 = arith.divf %17, %18 : vector<1x512xf32>
    %c0_10 = arith.constant 0 : index
    %c0_11 = arith.constant 0 : index
    %20 = vector.load %arg3[%c0_10, %c0_11] : memref<1x512xf32, #tpu.memory_space<vmem>>, vector<1x512xf32>
    %cst_12 = arith.constant 9.99999974E-6 : f32
    %21 = vector.broadcast %cst_12 : f32 to vector<1x512xf32>
    %22 = arith.addf %19, %21 : vector<1x512xf32>
    %23 = math.rsqrt %22 : vector<1x512xf32>
    %24 = arith.mulf %20, %23 : vector<1x512xf32>
    %25 = vector.broadcast %24 : vector<1x512xf32> to vector<8x512xf32>
    %26 = arith.mulf %14, %25 : vector<8x512xf32>
    %c0_13 = arith.constant 0 : index
    %c0_14 = arith.constant 0 : index
    %27 = vector.load %arg4[%c0_13, %c0_14] : memref<1x512xf32, #tpu.memory_space<vmem>>, vector<1x512xf32>
    %28 = vector.broadcast %27 : vector<1x512xf32> to vector<8x512xf32>
    %29 = arith.addf %26, %28 : vector<8x512xf32>
    %30 = arith.truncf %29 : vector<8x512xf32> to vector<8x512xbf16>
    %c0_15 = arith.constant 0 : index
    %c0_16 = arith.constant 0 : index
    %31 = vector.load %arg5[%c0_15, %c0_16] : memref<512x256xbf16, #tpu.memory_space<vmem>>, vector<512x256xbf16>
    %cst_17 = arith.constant dense<0.000000e+00> : vector<8x256xf32>
    %32 = tpu.matmul %30, %31, %cst_17 {dimension_numbers = #tpu.dot_dimension_numbers<[1], [0], [0], [1], [0, 0, 1, 1], [], []>} : vector<8x512xbf16>, vector<512x256xbf16>, vector<8x256xf32> -> vector<8x256xf32>
    %c0_18 = arith.constant 0 : index
    %c0_19 = arith.constant 0 : index
    %33 = vector.load %arg6[%c0_18, %c0_19] : memref<1x256xf32, #tpu.memory_space<vmem>>, vector<1x256xf32>
    %34 = vector.broadcast %33 : vector<1x256xf32> to vector<8x256xf32>
    %35 = arith.addf %32, %34 : vector<8x256xf32>
    %cst_20 = arith.constant 0.000000e+00 : f32
    %36 = vector.broadcast %cst_20 : f32 to vector<8x256xf32>
    %37 = arith.maximumf %35, %36 : vector<8x256xf32>
    %38 = arith.truncf %37 : vector<8x256xf32> to vector<8x256xbf16>
    %c0_21 = arith.constant 0 : index
    %c0_22 = arith.constant 0 : index
    %39 = vector.load %arg7[%c0_21, %c0_22] : memref<256x128xbf16, #tpu.memory_space<vmem>>, vector<256x128xbf16>
    %cst_23 = arith.constant dense<0.000000e+00> : vector<8x128xf32>
    %40 = tpu.matmul %38, %39, %cst_23 {dimension_numbers = #tpu.dot_dimension_numbers<[1], [0], [0], [1], [0, 0, 1, 1], [], []>} : vector<8x256xbf16>, vector<256x128xbf16>, vector<8x128xf32> -> vector<8x128xf32>
    %c0_24 = arith.constant 0 : index
    %c0_25 = arith.constant 0 : index
    %41 = vector.load %arg8[%c0_24, %c0_25] : memref<1x128xf32, #tpu.memory_space<vmem>>, vector<1x128xf32>
    %42 = vector.broadcast %41 : vector<1x128xf32> to vector<8x128xf32>
    %43 = arith.addf %40, %42 : vector<8x128xf32>
    %44 = math.tanh %43 : vector<8x128xf32>
    %c0_26 = arith.constant 0 : index
    %c0_27 = arith.constant 0 : index
    %45 = vector.load %arg9[%c0_26, %c0_27] : memref<8x128xf32, #tpu.memory_space<vmem>>, vector<8x128xf32>
    tpu.vector_store %arg9[%c0_26, %c0_27], %44 {strides = array<i32>} : memref<8x128xf32, #tpu.memory_space<vmem>>, vector<8x128xf32>,
    return
  }
}

</mosaic_0001>

<llo_original>
// kernel: tpu_custom_call.1
$region0: #{tpu_custom_call.1}
  #allocation0 [shape = 'u32[]', space=smem, size = 0x4, offset = 0x4, fixed_abs, tag = 'smem constant byte address 0x4 - core index']
  #allocation1 [shape = 'u32[144,128]{1,0:T(1,128)}', space=vmem, size = 0x12000, scoped, tag = 'internal scratch']
  %s0 = inlined_call_operand.hbm [shape: f32[8,32], index: 0, kind: input, shape index: {}]
  %s1 = inlined_call_operand.hbm [shape: bf16[32,512], index: 1, kind: input, shape index: {}]
  %s2 = inlined_call_operand.vmem [shape: f32[1,512], index: 2, kind: input, shape index: {}]
  %s3 = inlined_call_operand.vmem [shape: f32[1,512], index: 3, kind: input, shape index: {}]
  %s4 = inlined_call_operand.vmem [shape: f32[1,512], index: 4, kind: input, shape index: {}]
  %s5 = inlined_call_operand.hbm [shape: bf16[512,256], index: 5, kind: input, shape index: {}]
  %s6 = inlined_call_operand.vmem [shape: f32[1,256], index: 6, kind: input, shape index: {}]
  %s7 = inlined_call_operand.hbm [shape: bf16[256,128], index: 7, kind: input, shape index: {}]
  %s8 = inlined_call_operand.vmem [shape: f32[1,128], index: 8, kind: input, shape index: {}]
  %s9 = inlined_call_operand.hbm [shape: f32[8,128], index: 9, kind: output, shape index: {}]
  %s10 = sld [smem:[#allocation0]]
  $region62: #{tpu_custom_call.1} parent=0
    _
  %s12 = ssub.s32 1, %s10
  %s13 = scalar_select 0, %s12, %s10
  $region1: #{tpu_custom_call.1} parent=0
    #allocation2 [shape = 'u8[4096]{0}', space=vmem, size = 0x1000, scoped, tag = 'input window, operand 0, single buffered']
    #allocation3 [shape = 's32[1]{0}', space=sflag, size = 0x4, scoped, tag = 'scoped memory for tpu_custom_call.1']
    #allocation4 [shape = 's32[1]{0}', space=sflag, size = 0x4, scoped, tag = 'scoped memory for tpu_custom_call.1']
    #allocation5 [shape = 'u8[32768]{0}', space=vmem, size = 0x8000, scoped, tag = 'input window, operand 1, single buffered']
    #allocation6 [shape = 's32[1]{0}', space=sflag, size = 0x4, scoped, tag = 'scoped memory for tpu_custom_call.1']
    #allocation7 [shape = 'u8[262144]{0}', space=vmem, size = 0x40000, scoped, tag = 'input window, operand 5, single buffered']
    #allocation8 [shape = 'u8[65536]{0}', space=vmem, size = 0x10000, scoped, tag = 'input window, operand 7, single buffered']
    #allocation9 [shape = 's32[1]{0}', space=sflag, size = 0x4, scoped, tag = 'scoped memory for tpu_custom_call.1']
    #allocation10 [shape = 'u8[4096]{0}', space=vmem, size = 0x1000, scoped, tag = 'output window, operand 0, single buffered']
    %14 = vsyncpa [#allocation3], 0
    %15 = vsyncpa [#allocation6], 0
    %16 = vsyncpa [#allocation9], 0
    %17 = vsyncpa [#allocation4], 0
    // Predicated region
    $region2: #{tpu_custom_call.1} parent=1 // pred_check
      _
    $region3: #{tpu_custom_call.1} parent=1 // pred_check_branch
      %19 = sbr.rel (0) target = $region5
    $region4: #{tpu_custom_call.1} parent=1 // pred_region
      %s21 = ssub.s32 128, 128
      %22 = vsyncadd [#allocation3], %s21
      %s24 = sshll.u32 [#allocation2], 4
      %s25 = int_to_ptr.vmem [resolvable:$true] %s24
      %27 = dma.hbm_to_vmem [thread:$0]  %s0, 128, %s25, [#allocation3]
    $region5: #{tpu_custom_call.1} parent=1 // pred_fallthru
      _
    // Predicated region
    $region6: #{tpu_custom_call.1} parent=1 // pred_check
      _
    $region7: #{tpu_custom_call.1} parent=1 // pred_check_branch
      %29 = sbr.rel (0) target = $region9
    $region8: #{tpu_custom_call.1} parent=1 // pred_region
      %s31 = ssub.s32 1024, 1024
      %32 = vsyncadd [#allocation6], %s31
      %s33 = sshll.u32 [#allocation5], 4
      %s34 = int_to_ptr.vmem [resolvable:$true] %s33
      %39 = dma.hbm_to_vmem [thread:$0]  %s1, 1024, %s34, [#allocation6], 256, 256, 16
    $region9: #{tpu_custom_call.1} parent=1 // pred_fallthru
      _
    // Predicated region
    $region10: #{tpu_custom_call.1} parent=1 // pred_check
      _
    $region11: #{tpu_custom_call.1} parent=1 // pred_check_branch
      %41 = sbr.rel (0) target = $region13
    $region12: #{tpu_custom_call.1} parent=1 // pred_region
      _
    $region13: #{tpu_custom_call.1} parent=1 // pred_fallthru
      _
    // Predicated region
    $region14: #{tpu_custom_call.1} parent=1 // pred_check
      _
    $region15: #{tpu_custom_call.1} parent=1 // pred_check_branch
      %43 = sbr.rel (0) target = $region17
    $region16: #{tpu_custom_call.1} parent=1 // pred_region
      _
    $region17: #{tpu_custom_call.1} parent=1 // pred_fallthru
      _
    // Predicated region
    $region18: #{tpu_custom_call.1} parent=1 // pred_check
      _
    $region19: #{tpu_custom_call.1} parent=1 // pred_check_branch
      %45 = sbr.rel (0) target = $region21
    $region20: #{tpu_custom_call.1} parent=1 // pred_region
      _
    $region21: #{tpu_custom_call.1} parent=1 // pred_fallthru
      _
    // Predicated region
    $region22: #{tpu_custom_call.1} parent=1 // pred_check
      _
    $region23: #{tpu_custom_call.1} parent=1 // pred_check_branch
      %47 = sbr.rel (0) target = $region25
    $region24: #{tpu_custom_call.1} parent=1 // pred_region
      %s49 = ssub.s32 8192, 8192
      %50 = vsyncadd [#allocation6], %s49
      %s51 = sshll.u32 [#allocation7], 4
      %s52 = int_to_ptr.vmem [resolvable:$true] %s51
      %57 = dma.hbm_to_vmem [thread:$0]  %s5, 8192, %s52, [#allocation6], 128, 128, 8
    $region25: #{tpu_custom_call.1} parent=1 // pred_fallthru
      _
    // Predicated region
    $region26: #{tpu_custom_call.1} parent=1 // pred_check
      _
    $region27: #{tpu_custom_call.1} parent=1 // pred_check_branch
      %59 = sbr.rel (0) target = $region29
    $region28: #{tpu_custom_call.1} parent=1 // pred_region
      _
    $region29: #{tpu_custom_call.1} parent=1 // pred_fallthru
      _
    // Predicated region
    $region30: #{tpu_custom_call.1} parent=1 // pred_check
      _
    $region31: #{tpu_custom_call.1} parent=1 // pred_check_branch
      %61 = sbr.rel (0) target = $region33
    $region32: #{tpu_custom_call.1} parent=1 // pred_region
      %s63 = ssub.s32 2048, 2048
      %64 = vsyncadd [#allocation9], %s63
      %s65 = sshll.u32 [#allocation8], 4
      %s66 = int_to_ptr.vmem [resolvable:$true] %s65
      %71 = dma.hbm_to_vmem [thread:$0]  %s7, 2048, %s66, [#allocation9], 64, 64, 4
    $region33: #{tpu_custom_call.1} parent=1 // pred_fallthru
      _
    // Predicated region
    $region34: #{tpu_custom_call.1} parent=1 // pred_check
      _
    $region35: #{tpu_custom_call.1} parent=1 // pred_check_branch
      %73 = sbr.rel (0) target = $region37
    $region36: #{tpu_custom_call.1} parent=1 // pred_region
      _
    $region37: #{tpu_custom_call.1} parent=1 // pred_fallthru
      _
    // Predicated region
    $region38: #{tpu_custom_call.1} parent=1 // pred_check
      _
    $region39: #{tpu_custom_call.1} parent=1 // pred_check_branch
      %75 = sbr.rel (0) target = $region41
    $region40: #{tpu_custom_call.1} parent=1 // pred_region
      %76 = dma.done [#allocation3], 128
    $region41: #{tpu_custom_call.1} parent=1 // pred_fallthru
      _
    // Predicated region
    $region42: #{tpu_custom_call.1} parent=1 // pred_check
      _
    $region43: #{tpu_custom_call.1} parent=1 // pred_check_branch
      %78 = sbr.rel (0) target = $region45
    $region44: #{tpu_custom_call.1} parent=1 // pred_region
      %79 = dma.done [#allocation6], 1024
    $region45: #{tpu_custom_call.1} parent=1 // pred_fallthru
      _
    // Predicated region
    $region46: #{tpu_custom_call.1} parent=1 // pred_check
      _
    $region47: #{tpu_custom_call.1} parent=1 // pred_check_branch
      %81 = sbr.rel (0) target = $region49
    $region48: #{tpu_custom_call.1} parent=1 // pred_region
      %82 = dma.done [#allocation6], 8192
    $region49: #{tpu_custom_call.1} parent=1 // pred_fallthru
      _
    // Predicated region
    $region50: #{tpu_custom_call.1} parent=1 // pred_check
      _
    $region51: #{tpu_custom_call.1} parent=1 // pred_check_branch
      %84 = sbr.rel (0) target = $region53
    $region52: #{tpu_custom_call.1} parent=1 // pred_region
      %85 = dma.done [#allocation9], 2048
    $region53: #{tpu_custom_call.1} parent=1 // pred_fallthru
      _
    %v87 = vld [vmem:[#allocation2] sm:$0xff]
    %v88 = vpack.c.bf16 %v87, %v87
    %v89 = vld [vmem:[#allocation5] sm:$0xff]
    %v90 = vld [vmem:[#allocation5 + $0x8] sm:$0xff]
    %v91 = vld [vmem:[#allocation5 + $0x10] sm:$0xff]
    %v92 = vld [vmem:[#allocation5 + $0x18] sm:$0xff]
    %v93 = vld [vmem:[#allocation5 + $0x20] sm:$0xff]
    %v94 = vld [vmem:[#allocation5 + $0x28] sm:$0xff]
    %v95 = vld [vmem:[#allocation5 + $0x30] sm:$0xff]
    %v96 = vld [vmem:[#allocation5 + $0x38] sm:$0xff]
    %v97 = vld [vmem:[%s2] sm:$0xf]
    %v99 = vlaneseq
    %v100 = vshrl.u32 %v99, 7
    %v101 = vsub.s32 0, %v100
    %v102 = vrot.slane %v97, %v101
    %v103 = vlaneseq
    %v104 = vshrl.u32 %v103, 7
    %v105 = vsub.s32 1, %v104
    %v106 = vrot.slane %v97, %v105
    %v107 = vlaneseq
    %v108 = vshrl.u32 %v107, 7
    %v109 = vsub.s32 2, %v108
    %v110 = vrot.slane %v97, %v109
    %v111 = vlaneseq
    %v112 = vshrl.u32 %v111, 7
    %v113 = vsub.s32 3, %v112
    %v114 = vrot.slane %v97, %v113
    %v127 = vunpack.c.l.b16 %v89
    %v128 = vunpack.c.h.b16 %v89
    %v129 = vunpack.c.l.b16 %v90
    %v130 = vunpack.c.h.b16 %v90
    %v131 = vunpack.c.l.b16 %v91
    %v132 = vunpack.c.h.b16 %v91
    %v133 = vunpack.c.l.b16 %v92
    %v134 = vunpack.c.h.b16 %v92
    %v135 = vunpack.c.l.b16 %v93
    %v136 = vunpack.c.h.b16 %v93
    %v137 = vunpack.c.l.b16 %v94
    %v138 = vunpack.c.h.b16 %v94
    %v139 = vunpack.c.l.b16 %v95
    %v140 = vunpack.c.h.b16 %v95
    %v141 = vunpack.c.l.b16 %v96
    %v142 = vunpack.c.h.b16 %v96
    %v143 = vpack.c.b16 %v131, %v127
    %v144 = vpack.c.b16 %v132, %v128
    %v145 = vpack.c.b16 %v133, %v129
    %v146 = vpack.c.b16 %v134, %v130
    %v147 = vpack.c.b16 %v139, %v135
    %v148 = vpack.c.b16 %v140, %v136
    %v149 = vpack.c.b16 %v141, %v137
    %v150 = vpack.c.b16 %v142, %v138
    %vm159 = vcmask 261120
    %v161 = vsel %vm159, %v88, 0
    %163 = vmatprep.subr.bf16.mxu0 %v144
    %164 = vmatpush1.bf16.msra.mxu0 %v143
    %165 = vmatprep.subr.bf16.mxu0 %v148
    %166 = vmatpush1.bf16.msra.mxu0 %v147
    %167 = vmatprep.subr.bf16.mxu0 0
    %168 = vmatpush1.bf16.msra.mxu0 0
    %169 = vmatprep.subr.bf16.mxu0 0
    %170 = vmatpush1.bf16.msra.mxu0 0
    %171 = vmatprep.subr.bf16.mxu0 0
    %172 = vmatpush1.bf16.msra.mxu0 0
    %173 = vmatprep.subr.bf16.mxu0 0
    %174 = vmatpush1.bf16.msra.mxu0 0
    %175 = vmatprep.subr.bf16.mxu0 0
    %176 = vmatpush1.bf16.msra.mxu0 0
    %177 = vmatprep.subr.bf16.mxu0 0
    %178 = vmatpush1.bf16.msra.mxu0 0
    %179 = vmatprep.subr.bf16.mxu0 0
    %180 = vmatpush1.bf16.msra.mxu0 0
    %181 = vmatprep.subr.bf16.mxu0 0
    %182 = vmatpush1.bf16.msra.mxu0 0
    %183 = vmatprep.subr.bf16.mxu0 0
    %184 = vmatpush1.bf16.msra.mxu0 0
    %185 = vmatprep.subr.bf16.mxu0 0
    %186 = vmatpush1.bf16.msra.mxu0 0
    %187 = vmatprep.subr.bf16.mxu0 0
    %188 = vmatpush1.bf16.msra.mxu0 0
    %189 = vmatprep.subr.bf16.mxu0 0
    %190 = vmatpush1.bf16.msra.mxu0 0
    %191 = vmatprep.subr.bf16.mxu0 0
    %192 = vmatpush1.bf16.msra.mxu0 0
    %193 = vmatprep.subr.bf16.mxu0 0
    %194 = vmatpush1.bf16.msra.mxu0 0
    %195 = vmatprep.mubr.bf16.mxu0 0
    %196 = vmatmul.mubr.bf16.gmra.mrb[0].mxu0 %v161
    %v197 = vpop.f32.mrb[0].mxu0
    %v198 = vadd.f32 %v102, %v197
    %v199 = vpop.f32.mrb[0].mxu0
    %v200 = vadd.f32 %v106, %v199
    %v201 = vpop.f32.mrb[0].mxu0
    %v202 = vpop.f32.mrb[0].mxu0
    %203 = vdwg.mxu0
    %204 = vmatprep.subr.bf16.mxu0 %v146
    %205 = vmatpush1.bf16.msra.mxu0 %v145
    %206 = vmatprep.subr.bf16.mxu0 %v150
    %207 = vmatpush1.bf16.msra.mxu0 %v149
    %208 = vmatprep.subr.bf16.mxu0 0
    %209 = vmatpush1.bf16.msra.mxu0 0
    %210 = vmatprep.subr.bf16.mxu0 0
    %211 = vmatpush1.bf16.msra.mxu0 0
    %212 = vmatprep.subr.bf16.mxu0 0
    %213 = vmatpush1.bf16.msra.mxu0 0
    %214 = vmatprep.subr.bf16.mxu0 0
    %215 = vmatpush1.bf16.msra.mxu0 0
    %216 = vmatprep.subr.bf16.mxu0 0
    %217 = vmatpush1.bf16.msra.mxu0 0
    %218 = vmatprep.subr.bf16.mxu0 0
    %219 = vmatpush1.bf16.msra.mxu0 0
    %220 = vmatprep.subr.bf16.mxu0 0
    %221 = vmatpush1.bf16.msra.mxu0 0
    %222 = vmatprep.subr.bf16.mxu0 0
    %223 = vmatpush1.bf16.msra.mxu0 0
    %224 = vmatprep.subr.bf16.mxu0 0
    %225 = vmatpush1.bf16.msra.mxu0 0
    %226 = vmatprep.subr.bf16.mxu0 0
    %227 = vmatpush1.bf16.msra.mxu0 0
    %228 = vmatprep.subr.bf16.mxu0 0
    %229 = vmatpush1.bf16.msra.mxu0 0
    %230 = vmatprep.subr.bf16.mxu0 0
    %231 = vmatpush1.bf16.msra.mxu0 0
    %232 = vmatprep.subr.bf16.mxu0 0
    %233 = vmatpush1.bf16.msra.mxu0 0
    %234 = vmatprep.subr.bf16.mxu0 0
    %235 = vmatpush1.bf16.msra.mxu0 0
    %236 = vmatprep.mubr.bf16.mxu0 0
    %237 = vmatmul.mubr.bf16.gmra.mrb[0].mxu0 %v161
    %v238 = vpop.f32.mrb[0].mxu0
    %v239 = vadd.f32 %v110, %v238
    %v240 = vpop.f32.mrb[0].mxu0
    %v241 = vadd.f32 %v114, %v240
    %v242 = vpop.f32.mrb[0].mxu0
    %v243 = vpop.f32.mrb[0].mxu0
    %244 = vdwg.mxu0
    %v245 = vmax.f32 %v198, 0.0
    %v246 = vmax.f32 %v200, 0.0
    %v247 = vmax.f32 %v239, 0.0
    %v248 = vmax.f32 %v241, 0.0
    %v249 = vrot.slane %v245, 4
    %v250 = vadd.f32 %v245, %v249
    %v251 = vrot.slane %v250, 2
    %v252 = vadd.f32 %v250, %v251
    %v253 = vrot.slane %v252, 1
    %v254 = vadd.f32 %v252, %v253
    %v255 = vrot.slane %v246, 4
    %v256 = vadd.f32 %v246, %v255
    %v257 = vrot.slane %v256, 2
    %v258 = vadd.f32 %v256, %v257
    %v259 = vrot.slane %v258, 1
    %v260 = vadd.f32 %v258, %v259
    %v261 = vrot.slane %v247, 4
    %v262 = vadd.f32 %v247, %v261
    %v263 = vrot.slane %v262, 2
    %v264 = vadd.f32 %v262, %v263
    %v265 = vrot.slane %v264, 1
    %v266 = vadd.f32 %v264, %v265
    %v267 = vrot.slane %v248, 4
    %v268 = vadd.f32 %v248, %v267
    %v269 = vrot.slane %v268, 2
    %v270 = vadd.f32 %v268, %v269
    %v271 = vrot.slane %v270, 1
    %v272 = vadd.f32 %v270, %v271
    %v273 = vrcp.pop 8.0
    %v274 = vmul.f32 %v254, %v273
    %v275 = vmul.f32 %v260, %v273
    %v276 = vmul.f32 %v266, %v273
    %v277 = vmul.f32 %v272, %v273
    %v278 = vsub.f32 %v245, %v274
    %v279 = vsub.f32 %v246, %v275
    %v280 = vsub.f32 %v247, %v276
    %v281 = vsub.f32 %v248, %v277
    %v282 = vmul.f32 %v278, %v278
    %v283 = vmul.f32 %v279, %v279
    %v284 = vmul.f32 %v280, %v280
    %v285 = vmul.f32 %v281, %v281
    %v286 = vrot.slane %v282, 4
    %v287 = vadd.f32 %v282, %v286
    %v288 = vrot.slane %v287, 2
    %v289 = vadd.f32 %v287, %v288
    %v290 = vrot.slane %v289, 1
    %v291 = vadd.f32 %v289, %v290
    %v292 = vrot.slane %v283, 4
    %v293 = vadd.f32 %v283, %v292
    %v294 = vrot.slane %v293, 2
    %v295 = vadd.f32 %v293, %v294
    %v296 = vrot.slane %v295, 1
    %v297 = vadd.f32 %v295, %v296
    %v298 = vrot.slane %v284, 4
    %v299 = vadd.f32 %v284, %v298
    %v300 = vrot.slane %v299, 2
    %v301 = vadd.f32 %v299, %v300
    %v302 = vrot.slane %v301, 1
    %v303 = vadd.f32 %v301, %v302
    %v304 = vrot.slane %v285, 4
    %v305 = vadd.f32 %v285, %v304
    %v306 = vrot.slane %v305, 2
    %v307 = vadd.f32 %v305, %v306
    %v308 = vrot.slane %v307, 1
    %v309 = vadd.f32 %v307, %v308
    %v310 = vmul.f32 %v291, %v273
    %v311 = vmul.f32 %v297, %v273
    %v312 = vmul.f32 %v303, %v273
    %v313 = vmul.f32 %v309, %v273
    %v314 = vld [vmem:[%s3] sm:$0xf]
    %v315 = vadd.f32 %v310, 1e-05
    %v316 = vadd.f32 %v311, 1e-05
    %v317 = vadd.f32 %v312, 1e-05
    %v318 = vadd.f32 %v313, 1e-05
    %v319 = vrsqrt.pop %v315
    %v320 = vrsqrt.pop %v316
    %v321 = vrsqrt.pop %v317
    %v322 = vrsqrt.pop %v318
    %v327 = vcombine.low %v319, %v320
    %v328 = vcombine.low %v321, %v322
    %v330 = vunpack.c.l.s4 1966171168
    %v331 = vunpack.c.0.s8 %v330
    %v332 = vlaneseq
    %v333 = vshrl.u32 %v332, 7
    %v334 = vsub.s32 %v331, %v333
    %v335 = vrot.slane %v327, %v334
    %v337 = vunpack.c.l.s4 1966171168
    %v338 = vunpack.c.0.s8 %v337
    %v339 = vlaneseq
    %v340 = vshrl.u32 %v339, 7
    %v341 = vsub.s32 %v338, %v340
    %v342 = vrot.slane %v328, %v341
    %v343 = vcombine.low %v335, %v342
    %v345 = vunpack.c.l.s4 1966171168
    %v346 = vunpack.c.0.s8 %v345
    %v347 = vlaneseq
    %v348 = vshrl.u32 %v347, 7
    %v349 = vsub.s32 %v346, %v348
    %v350 = vrot.slane %v343, %v349
    %v352 = vmul.f32 %v314, %v350
    %v354 = vlaneseq
    %v355 = vshrl.u32 %v354, 7
    %v356 = vsub.s32 0, %v355
    %v357 = vrot.slane %v352, %v356
    %v358 = vlaneseq
    %v359 = vshrl.u32 %v358, 7
    %v360 = vsub.s32 1, %v359
    %v361 = vrot.slane %v352, %v360
    %v362 = vlaneseq
    %v363 = vshrl.u32 %v362, 7
    %v364 = vsub.s32 2, %v363
    %v365 = vrot.slane %v352, %v364
    %v366 = vlaneseq
    %v367 = vshrl.u32 %v366, 7
    %v368 = vsub.s32 3, %v367
    %v369 = vrot.slane %v352, %v368
    %v374 = vmul.f32 %v278, %v357
    %v375 = vmul.f32 %v279, %v361
    %v376 = vmul.f32 %v280, %v365
    %v377 = vmul.f32 %v281, %v369
    %v378 = vld [vmem:[%s4] sm:$0xf]
    %v380 = vlaneseq
    %v381 = vshrl.u32 %v380, 7
    %v382 = vsub.s32 0, %v381
    %v383 = vrot.slane %v378, %v382
    %v384 = vlaneseq
    %v385 = vshrl.u32 %v384, 7
    %v386 = vsub.s32 1, %v385
    %v387 = vrot.slane %v378, %v386
    %v388 = vlaneseq
    %v389 = vshrl.u32 %v388, 7
    %v390 = vsub.s32 2, %v389
    %v391 = vrot.slane %v378, %v390
    %v392 = vlaneseq
    %v393 = vshrl.u32 %v392, 7
    %v394 = vsub.s32 3, %v393
    %v395 = vrot.slane %v378, %v394
    %v400 = vadd.f32 %v374, %v383
    %v401 = vadd.f32 %v375, %v387
    %v402 = vadd.f32 %v376, %v391
    %v403 = vadd.f32 %v377, %v395
    %v404 = vpack.c.bf16 %v400, %v400
    %v405 = vpack.c.bf16 %v401, %v401
    %v406 = vpack.c.bf16 %v402, %v402
    %v407 = vpack.c.bf16 %v403, %v403
    %v408 = vld [vmem:[#allocation7] sm:$0xff]
    %v409 = vld [vmem:[#allocation7 + $0x8] sm:$0xff]
    %v410 = vld [vmem:[#allocation7 + $0x10] sm:$0xff]
    %v411 = vld [vmem:[#allocation7 + $0x18] sm:$0xff]
    %v412 = vld [vmem:[#allocation7 + $0x20] sm:$0xff]
    %v413 = vld [vmem:[#allocation7 + $0x28] sm:$0xff]
    %v414 = vld [vmem:[#allocation7 + $0x30] sm:$0xff]
    %v415 = vld [vmem:[#allocation7 + $0x38] sm:$0xff]
    %v416 = vld [vmem:[#allocation7 + $0x40] sm:$0xff]
    %v417 = vld [vmem:[#allocation7 + $0x48] sm:$0xff]
    %v418 = vld [vmem:[#allocation7 + $0x50] sm:$0xff]
    %v419 = vld [vmem:[#allocation7 + $0x58] sm:$0xff]
    %v420 = vld [vmem:[#allocation7 + $0x60] sm:$0xff]
    %v421 = vld [vmem:[#allocation7 + $0x68] sm:$0xff]
    %v422 = vld [vmem:[#allocation7 + $0x70] sm:$0xff]
    %v423 = vld [vmem:[#allocation7 + $0x78] sm:$0xff]
    %v424 = vld [vmem:[#allocation7 + $0x80] sm:$0xff]
    %v425 = vld [vmem:[#allocation7 + $0x88] sm:$0xff]
    %v426 = vld [vmem:[#allocation7 + $0x90] sm:$0xff]
    %v427 = vld [vmem:[#allocation7 + $0x98] sm:$0xff]
    %v428 = vld [vmem:[#allocation7 + $0xa0] sm:$0xff]
    %v429 = vld [vmem:[#allocation7 + $0xa8] sm:$0xff]
    %v430 = vld [vmem:[#allocation7 + $0xb0] sm:$0xff]
    %v431 = vld [vmem:[#allocation7 + $0xb8] sm:$0xff]
    %v432 = vld [vmem:[#allocation7 + $0xc0] sm:$0xff]
    %v433 = vld [vmem:[#allocation7 + $0xc8] sm:$0xff]
    %v434 = vld [vmem:[#allocation7 + $0xd0] sm:$0xff]
    %v435 = vld [vmem:[#allocation7 + $0xd8] sm:$0xff]
    %v436 = vld [vmem:[#allocation7 + $0xe0] sm:$0xff]
    %v437 = vld [vmem:[#allocation7 + $0xe8] sm:$0xff]
    %v438 = vld [vmem:[#allocation7 + $0xf0] sm:$0xff]
    %v439 = vld [vmem:[#allocation7 + $0xf8] sm:$0xff]
    %v440 = vld [vmem:[#allocation7 + $0x100] sm:$0xff]
    %v441 = vld [vmem:[#allocation7 + $0x108] sm:$0xff]
    %v442 = vld [vmem:[#allocation7 + $0x110] sm:$0xff]
    %v443 = vld [vmem:[#allocation7 + $0x118] sm:$0xff]
    %v444 = vld [vmem:[#allocation7 + $0x120] sm:$0xff]
    %v445 = vld [vmem:[#allocation7 + $0x128] sm:$0xff]
    %v446 = vld [vmem:[#allocation7 + $0x130] sm:$0xff]
    %v447 = vld [vmem:[#allocation7 + $0x138] sm:$0xff]
    %v448 = vld [vmem:[#allocation7 + $0x140] sm:$0xff]
    %v449 = vld [vmem:[#allocation7 + $0x148] sm:$0xff]
    %v450 = vld [vmem:[#allocation7 + $0x150] sm:$0xff]
    %v451 = vld [vmem:[#allocation7 + $0x158] sm:$0xff]
    %v452 = vld [vmem:[#allocation7 + $0x160] sm:$0xff]
    %v453 = vld [vmem:[#allocation7 + $0x168] sm:$0xff]
    %v454 = vld [vmem:[#allocation7 + $0x170] sm:$0xff]
    %v455 = vld [vmem:[#allocation7 + $0x178] sm:$0xff]
    %v456 = vld [vmem:[#allocation7 + $0x180] sm:$0xff]
    %v457 = vld [vmem:[#allocation7 + $0x188] sm:$0xff]
    %v458 = vld [vmem:[#allocation7 + $0x190] sm:$0xff]
    %v459 = vld [vmem:[#allocation7 + $0x198] sm:$0xff]
    %v460 = vld [vmem:[#allocation7 + $0x1a0] sm:$0xff]
    %v461 = vld [vmem:[#allocation7 + $0x1a8] sm:$0xff]
    %v462 = vld [vmem:[#allocation7 + $0x1b0] sm:$0xff]
    %v463 = vld [vmem:[#allocation7 + $0x1b8] sm:$0xff]
    %v464 = vld [vmem:[#allocation7 + $0x1c0] sm:$0xff]
    %v465 = vld [vmem:[#allocation7 + $0x1c8] sm:$0xff]
    %v466 = vld [vmem:[#allocation7 + $0x1d0] sm:$0xff]
    %v467 = vld [vmem:[#allocation7 + $0x1d8] sm:$0xff]
    %v468 = vld [vmem:[#allocation7 + $0x1e0] sm:$0xff]
    %v469 = vld [vmem:[#allocation7 + $0x1e8] sm:$0xff]
    %v470 = vld [vmem:[#allocation7 + $0x1f0] sm:$0xff]
    %v471 = vld [vmem:[#allocation7 + $0x1f8] sm:$0xff]
    %v472 = vld [vmem:[%s6] sm:$0x3]
    %v474 = vlaneseq
    %v475 = vshrl.u32 %v474, 7
    %v476 = vsub.s32 0, %v475
    %v477 = vrot.slane %v472, %v476
    %v478 = vlaneseq
    %v479 = vshrl.u32 %v478, 7
    %v480 = vsub.s32 1, %v479
    %v481 = vrot.slane %v472, %v480
    %v548 = vunpack.c.l.b16 %v408
    %v549 = vunpack.c.h.b16 %v408
    %v550 = vunpack.c.l.b16 %v409
    %v551 = vunpack.c.h.b16 %v409
    %v552 = vunpack.c.l.b16 %v410
    %v553 = vunpack.c.h.b16 %v410
    %v554 = vunpack.c.l.b16 %v411
    %v555 = vunpack.c.h.b16 %v411
    %v556 = vunpack.c.l.b16 %v412
    %v557 = vunpack.c.h.b16 %v412
    %v558 = vunpack.c.l.b16 %v413
    %v559 = vunpack.c.h.b16 %v413
    %v560 = vunpack.c.l.b16 %v414
    %v561 = vunpack.c.h.b16 %v414
    %v562 = vunpack.c.l.b16 %v415
    %v563 = vunpack.c.h.b16 %v415
    %v564 = vunpack.c.l.b16 %v416
    %v565 = vunpack.c.h.b16 %v416
    %v566 = vunpack.c.l.b16 %v417
    %v567 = vunpack.c.h.b16 %v417
    %v568 = vunpack.c.l.b16 %v418
    %v569 = vunpack.c.h.b16 %v418
    %v570 = vunpack.c.l.b16 %v419
    %v571 = vunpack.c.h.b16 %v419
    %v572 = vunpack.c.l.b16 %v420
    %v573 = vunpack.c.h.b16 %v420
    %v574 = vunpack.c.l.b16 %v421
    %v575 = vunpack.c.h.b16 %v421
    %v576 = vunpack.c.l.b16 %v422
    %v577 = vunpack.c.h.b16 %v422
    %v578 = vunpack.c.l.b16 %v423
    %v579 = vunpack.c.h.b16 %v423
    %v580 = vunpack.c.l.b16 %v424
    %v581 = vunpack.c.h.b16 %v424
    %v582 = vunpack.c.l.b16 %v425
    %v583 = vunpack.c.h.b16 %v425
    %v584 = vunpack.c.l.b16 %v426
    %v585 = vunpack.c.h.b16 %v426
    %v586 = vunpack.c.l.b16 %v427
    %v587 = vunpack.c.h.b16 %v427
    %v588 = vunpack.c.l.b16 %v428
    %v589 = vunpack.c.h.b16 %v428
    %v590 = vunpack.c.l.b16 %v429
    %v591 = vunpack.c.h.b16 %v429
    %v592 = vunpack.c.l.b16 %v430
    %v593 = vunpack.c.h.b16 %v430
    %v594 = vunpack.c.l.b16 %v431
    %v595 = vunpack.c.h.b16 %v431
    %v596 = vunpack.c.l.b16 %v432
    %v597 = vunpack.c.h.b16 %v432
    %v598 = vunpack.c.l.b16 %v433
    %v599 = vunpack.c.h.b16 %v433
    %v600 = vunpack.c.l.b16 %v434
    %v601 = vunpack.c.h.b16 %v434
    %v602 = vunpack.c.l.b16 %v435
    %v603 = vunpack.c.h.b16 %v435
    %v604 = vunpack.c.l.b16 %v436
    %v605 = vunpack.c.h.b16 %v436
    %v606 = vunpack.c.l.b16 %v437
    %v607 = vunpack.c.h.b16 %v437
    %v608 = vunpack.c.l.b16 %v438
    %v609 = vunpack.c.h.b16 %v438
    %v610 = vunpack.c.l.b16 %v439
    %v611 = vunpack.c.h.b16 %v439
    %v612 = vunpack.c.l.b16 %v440
    %v613 = vunpack.c.h.b16 %v440
    %v614 = vunpack.c.l.b16 %v441
    %v615 = vunpack.c.h.b16 %v441
    %v616 = vunpack.c.l.b16 %v442
    %v617 = vunpack.c.h.b16 %v442
    %v618 = vunpack.c.l.b16 %v443
    %v619 = vunpack.c.h.b16 %v443
    %v620 = vunpack.c.l.b16 %v444
    %v621 = vunpack.c.h.b16 %v444
    %v622 = vunpack.c.l.b16 %v445
    %v623 = vunpack.c.h.b16 %v445
    %v624 = vunpack.c.l.b16 %v446
    %v625 = vunpack.c.h.b16 %v446
    %v626 = vunpack.c.l.b16 %v447
    %v627 = vunpack.c.h.b16 %v447
    %v628 = vunpack.c.l.b16 %v448
    %v629 = vunpack.c.h.b16 %v448
    %v630 = vunpack.c.l.b16 %v449
    %v631 = vunpack.c.h.b16 %v449
    %v632 = vunpack.c.l.b16 %v450
    %v633 = vunpack.c.h.b16 %v450
    %v634 = vunpack.c.l.b16 %v451
    %v635 = vunpack.c.h.b16 %v451
    %v636 = vunpack.c.l.b16 %v452
    %v637 = vunpack.c.h.b16 %v452
    %v638 = vunpack.c.l.b16 %v453
    %v639 = vunpack.c.h.b16 %v453
    %v640 = vunpack.c.l.b16 %v454
    %v641 = vunpack.c.h.b16 %v454
    %v642 = vunpack.c.l.b16 %v455
    %v643 = vunpack.c.h.b16 %v455
    %v644 = vunpack.c.l.b16 %v456
    %v645 = vunpack.c.h.b16 %v456
    %v646 = vunpack.c.l.b16 %v457
    %v647 = vunpack.c.h.b16 %v457
    %v648 = vunpack.c.l.b16 %v458
    %v649 = vunpack.c.h.b16 %v458
    %v650 = vunpack.c.l.b16 %v459
    %v651 = vunpack.c.h.b16 %v459
    %v652 = vunpack.c.l.b16 %v460
    %v653 = vunpack.c.h.b16 %v460
    %v654 = vunpack.c.l.b16 %v461
    %v655 = vunpack.c.h.b16 %v461
    %v656 = vunpack.c.l.b16 %v462
    %v657 = vunpack.c.h.b16 %v462
    %v658 = vunpack.c.l.b16 %v463
    %v659 = vunpack.c.h.b16 %v463
    %v660 = vunpack.c.l.b16 %v464
    %v661 = vunpack.c.h.b16 %v464
    %v662 = vunpack.c.l.b16 %v465
    %v663 = vunpack.c.h.b16 %v465
    %v664 = vunpack.c.l.b16 %v466
    %v665 = vunpack.c.h.b16 %v466
    %v666 = vunpack.c.l.b16 %v467
    %v667 = vunpack.c.h.b16 %v467
    %v668 = vunpack.c.l.b16 %v468
    %v669 = vunpack.c.h.b16 %v468
    %v670 = vunpack.c.l.b16 %v469
    %v671 = vunpack.c.h.b16 %v469
    %v672 = vunpack.c.l.b16 %v470
    %v673 = vunpack.c.h.b16 %v470
    %v674 = vunpack.c.l.b16 %v471
    %v675 = vunpack.c.h.b16 %v471
    %v676 = vpack.c.b16 %v550, %v548
    %v677 = vpack.c.b16 %v551, %v549
    %v678 = vpack.c.b16 %v554, %v552
    %v679 = vpack.c.b16 %v555, %v553
    %v680 = vpack.c.b16 %v558, %v556
    %v681 = vpack.c.b16 %v559, %v557
    %v682 = vpack.c.b16 %v562, %v560
    %v683 = vpack.c.b16 %v563, %v561
    %v684 = vpack.c.b16 %v566, %v564
    %v685 = vpack.c.b16 %v567, %v565
    %v686 = vpack.c.b16 %v570, %v568
    %v687 = vpack.c.b16 %v571, %v569
    %v688 = vpack.c.b16 %v574, %v572
    %v689 = vpack.c.b16 %v575, %v573
    %v690 = vpack.c.b16 %v578, %v576
    %v691 = vpack.c.b16 %v579, %v577
    %v692 = vpack.c.b16 %v582, %v580
    %v693 = vpack.c.b16 %v583, %v581
    %v694 = vpack.c.b16 %v586, %v584
    %v695 = vpack.c.b16 %v587, %v585
    %v696 = vpack.c.b16 %v590, %v588
    %v697 = vpack.c.b16 %v591, %v589
    %v698 = vpack.c.b16 %v594, %v592
    %v699 = vpack.c.b16 %v595, %v593
    %v700 = vpack.c.b16 %v598, %v596
    %v701 = vpack.c.b16 %v599, %v597
    %v702 = vpack.c.b16 %v602, %v600
    %v703 = vpack.c.b16 %v603, %v601
    %v704 = vpack.c.b16 %v606, %v604
    %v705 = vpack.c.b16 %v607, %v605
    %v706 = vpack.c.b16 %v610, %v608
    %v707 = vpack.c.b16 %v611, %v609
    %v708 = vpack.c.b16 %v614, %v612
    %v709 = vpack.c.b16 %v615, %v613
    %v710 = vpack.c.b16 %v618, %v616
    %v711 = vpack.c.b16 %v619, %v617
    %v712 = vpack.c.b16 %v622, %v620
    %v713 = vpack.c.b16 %v623, %v621
    %v714 = vpack.c.b16 %v626, %v624
    %v715 = vpack.c.b16 %v627, %v625
    %v716 = vpack.c.b16 %v630, %v628
    %v717 = vpack.c.b16 %v631, %v629
    %v718 = vpack.c.b16 %v634, %v632
    %v719 = vpack.c.b16 %v635, %v633
    %v720 = vpack.c.b16 %v638, %v636
    %v721 = vpack.c.b16 %v639, %v637
    %v722 = vpack.c.b16 %v642, %v640
    %v723 = vpack.c.b16 %v643, %v641
    %v724 = vpack.c.b16 %v646, %v644
    %v725 = vpack.c.b16 %v647, %v645
    %v726 = vpack.c.b16 %v650, %v648
    %v727 = vpack.c.b16 %v651, %v649
    %v728 = vpack.c.b16 %v654, %v652
    %v729 = vpack.c.b16 %v655, %v653
    %v730 = vpack.c.b16 %v658, %v656
    %v731 = vpack.c.b16 %v659, %v657
    %v732 = vpack.c.b16 %v662, %v660
    %v733 = vpack.c.b16 %v663, %v661
    %v734 = vpack.c.b16 %v666, %v664
    %v735 = vpack.c.b16 %v667, %v665
    %v736 = vpack.c.b16 %v670, %v668
    %v737 = vpack.c.b16 %v671, %v669
    %v738 = vpack.c.b16 %v674, %v672
    %v739 = vpack.c.b16 %v675, %v673
    %804 = vmatprep.subr.bf16.mxu0 %v677
    %805 = vmatpush1.bf16.msra.mxu0 %v676
    %806 = vmatprep.subr.bf16.mxu0 %v679
    %807 = vmatpush1.bf16.msra.mxu0 %v678
    %808 = vmatprep.subr.bf16.mxu0 %v681
    %809 = vmatpush1.bf16.msra.mxu0 %v680
    %810 = vmatprep.subr.bf16.mxu0 %v683
    %811 = vmatpush1.bf16.msra.mxu0 %v682
    %812 = vmatprep.subr.bf16.mxu0 %v685
    %813 = vmatpush1.bf16.msra.mxu0 %v684
    %814 = vmatprep.subr.bf16.mxu0 %v687
    %815 = vmatpush1.bf16.msra.mxu0 %v686
    %816 = vmatprep.subr.bf16.mxu0 %v689
    %817 = vmatpush1.bf16.msra.mxu0 %v688
    %818 = vmatprep.subr.bf16.mxu0 %v691
    %819 = vmatpush1.bf16.msra.mxu0 %v690
    %820 = vmatprep.subr.bf16.mxu0 %v693
    %821 = vmatpush1.bf16.msra.mxu0 %v692
    %822 = vmatprep.subr.bf16.mxu0 %v695
    %823 = vmatpush1.bf16.msra.mxu0 %v694
    %824 = vmatprep.subr.bf16.mxu0 %v697
    %825 = vmatpush1.bf16.msra.mxu0 %v696
    %826 = vmatprep.subr.bf16.mxu0 %v699
    %827 = vmatpush1.bf16.msra.mxu0 %v698
    %828 = vmatprep.subr.bf16.mxu0 %v701
    %829 = vmatpush1.bf16.msra.mxu0 %v700
    %830 = vmatprep.subr.bf16.mxu0 %v703
    %831 = vmatpush1.bf16.msra.mxu0 %v702
    %832 = vmatprep.subr.bf16.mxu0 %v705
    %833 = vmatpush1.bf16.msra.mxu0 %v704
    %834 = vmatprep.subr.bf16.mxu0 %v707
    %835 = vmatpush1.bf16.msra.mxu0 %v706
    %836 = vmatprep.mubr.bf16.mxu0 %v405
    %837 = vmatmul.mubr.bf16.gmra.mrb[0].mxu0 %v404
    %v838 = vpop.f32.mrb[0].mxu0
    %v839 = vadd.f32 %v477, %v838
    %v840 = vpop.f32.mrb[0].mxu0
    %v841 = vadd.f32 %v481, %v840
    %v842 = vpop.f32.mrb[0].mxu0
    %v843 = vpop.f32.mrb[0].mxu0
    %844 = vdwg.mxu0
    %845 = vmatprep.subr.bf16.mxu0 %v709
    %846 = vmatpush1.bf16.msra.mxu0 %v708
    %847 = vmatprep.subr.bf16.mxu0 %v711
    %848 = vmatpush1.bf16.msra.mxu0 %v710
    %849 = vmatprep.subr.bf16.mxu0 %v713
    %850 = vmatpush1.bf16.msra.mxu0 %v712
    %851 = vmatprep.subr.bf16.mxu0 %v715
    %852 = vmatpush1.bf16.msra.mxu0 %v714
    %853 = vmatprep.subr.bf16.mxu0 %v717
    %854 = vmatpush1.bf16.msra.mxu0 %v716
    %855 = vmatprep.subr.bf16.mxu0 %v719
    %856 = vmatpush1.bf16.msra.mxu0 %v718
    %857 = vmatprep.subr.bf16.mxu0 %v721
    %858 = vmatpush1.bf16.msra.mxu0 %v720
    %859 = vmatprep.subr.bf16.mxu0 %v723
    %860 = vmatpush1.bf16.msra.mxu0 %v722
    %861 = vmatprep.subr.bf16.mxu0 %v725
    %862 = vmatpush1.bf16.msra.mxu0 %v724
    %863 = vmatprep.subr.bf16.mxu0 %v727
    %864 = vmatpush1.bf16.msra.mxu0 %v726
    %865 = vmatprep.subr.bf16.mxu0 %v729
    %866 = vmatpush1.bf16.msra.mxu0 %v728
    %867 = vmatprep.subr.bf16.mxu0 %v731
    %868 = vmatpush1.bf16.msra.mxu0 %v730
    %869 = vmatprep.subr.bf16.mxu0 %v733
    %870 = vmatpush1.bf16.msra.mxu0 %v732
    %871 = vmatprep.subr.bf16.mxu0 %v735
    %872 = vmatpush1.bf16.msra.mxu0 %v734
    %873 = vmatprep.subr.bf16.mxu0 %v737
    %874 = vmatpush1.bf16.msra.mxu0 %v736
    %875 = vmatprep.subr.bf16.mxu0 %v739
    %876 = vmatpush1.bf16.msra.mxu0 %v738
    %877 = vmatprep.mubr.bf16.mxu0 %v407
    %878 = vmatmul.mubr.bf16.gmra.mrb[0].mxu0 %v406
    %v879 = vpop.f32.mrb[0].mxu0
    %v880 = vadd.f32 %v839, %v879
    %v881 = vpop.f32.mrb[0].mxu0
    %v882 = vadd.f32 %v841, %v881
    %v883 = vpop.f32.mrb[0].mxu0
    %v884 = vpop.f32.mrb[0].mxu0
    %885 = vdwg.mxu0
    %v886 = vmax.f32 %v880, 0.0
    %v887 = vmax.f32 %v882, 0.0
    %v888 = vpack.c.bf16 %v886, %v886
    %v889 = vpack.c.bf16 %v887, %v887
    %v890 = vld [vmem:[#allocation8] sm:$0xf]
    %v891 = vld [vmem:[#allocation8 + $0x4] sm:$0xf]
    %v892 = vld [vmem:[#allocation8 + $0x8] sm:$0xf]
    %v893 = vld [vmem:[#allocation8 + $0xc] sm:$0xf]
    %v894 = vld [vmem:[#allocation8 + $0x10] sm:$0xf]
    %v895 = vld [vmem:[#allocation8 + $0x14] sm:$0xf]
    %v896 = vld [vmem:[#allocation8 + $0x18] sm:$0xf]
    %v897 = vld [vmem:[#allocation8 + $0x1c] sm:$0xf]
    %v898 = vld [vmem:[#allocation8 + $0x20] sm:$0xf]
    %v899 = vld [vmem:[#allocation8 + $0x24] sm:$0xf]
    %v900 = vld [vmem:[#allocation8 + $0x28] sm:$0xf]
    %v901 = vld [vmem:[#allocation8 + $0x2c] sm:$0xf]
    %v902 = vld [vmem:[#allocation8 + $0x30] sm:$0xf]
    %v903 = vld [vmem:[#allocation8 + $0x34] sm:$0xf]
    %v904 = vld [vmem:[#allocation8 + $0x38] sm:$0xf]
    %v905 = vld [vmem:[#allocation8 + $0x3c] sm:$0xf]
    %v906 = vld [vmem:[#allocation8 + $0x40] sm:$0xf]
    %v907 = vld [vmem:[#allocation8 + $0x44] sm:$0xf]
    %v908 = vld [vmem:[#allocation8 + $0x48] sm:$0xf]
    %v909 = vld [vmem:[#allocation8 + $0x4c] sm:$0xf]
    %v910 = vld [vmem:[#allocation8 + $0x50] sm:$0xf]
    %v911 = vld [vmem:[#allocation8 + $0x54] sm:$0xf]
    %v912 = vld [vmem:[#allocation8 + $0x58] sm:$0xf]
    %v913 = vld [vmem:[#allocation8 + $0x5c] sm:$0xf]
    %v914 = vld [vmem:[#allocation8 + $0x60] sm:$0xf]
    %v915 = vld [vmem:[#allocation8 + $0x64] sm:$0xf]
    %v916 = vld [vmem:[#allocation8 + $0x68] sm:$0xf]
    %v917 = vld [vmem:[#allocation8 + $0x6c] sm:$0xf]
    %v918 = vld [vmem:[#allocation8 + $0x70] sm:$0xf]
    %v919 = vld [vmem:[#allocation8 + $0x74] sm:$0xf]
    %v920 = vld [vmem:[#allocation8 + $0x78] sm:$0xf]
    %v921 = vld [vmem:[#allocation8 + $0x7c] sm:$0xf]
    %v922 = vld [vmem:[%s8] sm:$0x1]
    %v924 = vlaneseq
    %v925 = vshrl.u32 %v924, 7
    %v926 = vsub.s32 0, %v925
    %v927 = vrot.slane %v922, %v926
    %v961 = vunpack.c.l.b16 %v890
    %v962 = vunpack.c.l.b16 %v891
    %v963 = vunpack.c.l.b16 %v892
    %v964 = vunpack.c.l.b16 %v893
    %v965 = vunpack.c.l.b16 %v894
    %v966 = vunpack.c.l.b16 %v895
    %v967 = vunpack.c.l.b16 %v896
    %v968 = vunpack.c.l.b16 %v897
    %v969 = vunpack.c.l.b16 %v898
    %v970 = vunpack.c.l.b16 %v899
    %v971 = vunpack.c.l.b16 %v900
    %v972 = vunpack.c.l.b16 %v901
    %v973 = vunpack.c.l.b16 %v902
    %v974 = vunpack.c.l.b16 %v903
    %v975 = vunpack.c.l.b16 %v904
    %v976 = vunpack.c.l.b16 %v905
    %v977 = vunpack.c.l.b16 %v906
    %v978 = vunpack.c.l.b16 %v907
    %v979 = vunpack.c.l.b16 %v908
    %v980 = vunpack.c.l.b16 %v909
    %v981 = vunpack.c.l.b16 %v910
    %v982 = vunpack.c.l.b16 %v911
    %v983 = vunpack.c.l.b16 %v912
    %v984 = vunpack.c.l.b16 %v913
    %v985 = vunpack.c.l.b16 %v914
    %v986 = vunpack.c.l.b16 %v915
    %v987 = vunpack.c.l.b16 %v916
    %v988 = vunpack.c.l.b16 %v917
    %v989 = vunpack.c.l.b16 %v918
    %v990 = vunpack.c.l.b16 %v919
    %v991 = vunpack.c.l.b16 %v920
    %v992 = vunpack.c.l.b16 %v921
    %v993 = vpack.c.b16 %v962, %v961
    %v994 = vpack.c.b16 %v964, %v963
    %v995 = vpack.c.b16 %v966, %v965
    %v996 = vpack.c.b16 %v968, %v967
    %v997 = vpack.c.b16 %v970, %v969
    %v998 = vpack.c.b16 %v972, %v971
    %v999 = vpack.c.b16 %v974, %v973
    %v1000 = vpack.c.b16 %v976, %v975
    %v1001 = vpack.c.b16 %v978, %v977
    %v1002 = vpack.c.b16 %v980, %v979
    %v1003 = vpack.c.b16 %v982, %v981
    %v1004 = vpack.c.b16 %v984, %v983
    %v1005 = vpack.c.b16 %v986, %v985
    %v1006 = vpack.c.b16 %v988, %v987
    %v1007 = vpack.c.b16 %v990, %v989
    %v1008 = vpack.c.b16 %v992, %v991
    %1025 = vmatprep.subr.bf16.mxu0 0
    %1026 = vmatpush1.bf16.msra.mxu0 %v993
    %1027 = vmatprep.subr.bf16.mxu0 0
    %1028 = vmatpush1.bf16.msra.mxu0 %v994
    %1029 = vmatprep.subr.bf16.mxu0 0
    %1030 = vmatpush1.bf16.msra.mxu0 %v995
    %1031 = vmatprep.subr.bf16.mxu0 0
    %1032 = vmatpush1.bf16.msra.mxu0 %v996
    %1033 = vmatprep.subr.bf16.mxu0 0
    %1034 = vmatpush1.bf16.msra.mxu0 %v997
    %1035 = vmatprep.subr.bf16.mxu0 0
    %1036 = vmatpush1.bf16.msra.mxu0 %v998
    %1037 = vmatprep.subr.bf16.mxu0 0
    %1038 = vmatpush1.bf16.msra.mxu0 %v999
    %1039 = vmatprep.subr.bf16.mxu0 0
    %1040 = vmatpush1.bf16.msra.mxu0 %v1000
    %1041 = vmatprep.subr.bf16.mxu0 0
    %1042 = vmatpush1.bf16.msra.mxu0 %v1001
    %1043 = vmatprep.subr.bf16.mxu0 0
    %1044 = vmatpush1.bf16.msra.mxu0 %v1002
    %1045 = vmatprep.subr.bf16.mxu0 0
    %1046 = vmatpush1.bf16.msra.mxu0 %v1003
    %1047 = vmatprep.subr.bf16.mxu0 0
    %1048 = vmatpush1.bf16.msra.mxu0 %v1004
    %1049 = vmatprep.subr.bf16.mxu0 0
    %1050 = vmatpush1.bf16.msra.mxu0 %v1005
    %1051 = vmatprep.subr.bf16.mxu0 0
    %1052 = vmatpush1.bf16.msra.mxu0 %v1006
    %1053 = vmatprep.subr.bf16.mxu0 0
    %1054 = vmatpush1.bf16.msra.mxu0 %v1007
    %1055 = vmatprep.subr.bf16.mxu0 0
    %1056 = vmatpush1.bf16.msra.mxu0 %v1008
    %1057 = vmatprep.mubr.bf16.mxu0 %v889
    %1058 = vmatmul.mubr.bf16.gmra.mrb[0].mxu0 %v888
    %v1059 = vpop.f32.mrb[0].mxu0
    %v1060 = vadd.f32 %v927, %v1059
    %v1061 = vpop.f32.mrb[0].mxu0
    %v1062 = vpop.f32.mrb[0].mxu0
    %v1063 = vpop.f32.mrb[0].mxu0
    %1064 = vdwg.mxu0
    %v1065 = vtanh.pop %v1060
    %1066 = vst [vmem:[#allocation10] sm:$0xff] %v1065
    // Predicated region
    $region54: #{tpu_custom_call.1} parent=1 // pred_check
      _
    $region55: #{tpu_custom_call.1} parent=1 // pred_check_branch
      %1068 = sbr.rel (0) target = $region57
    $region56: #{tpu_custom_call.1} parent=1 // pred_region
      %s1070 = ssub.s32 128, 128
      %1071 = vsyncadd [#allocation4], %s1070
      %s1073 = sshll.u32 [#allocation10], 4
      %s1074 = int_to_ptr.vmem [resolvable:$true] %s1073
      %1076 = dma.vmem_to_hbm [thread:$0]  %s1074, 128, %s9, [#allocation4]
    $region57: #{tpu_custom_call.1} parent=1 // pred_fallthru
      _
    // Predicated region
    $region58: #{tpu_custom_call.1} parent=1 // pred_check
      _
    $region59: #{tpu_custom_call.1} parent=1 // pred_check_branch
      %1078 = sbr.rel (0) target = $region61
    $region60: #{tpu_custom_call.1} parent=1 // pred_region
      %1079 = dma.done [#allocation4], 128
    $region61: #{tpu_custom_call.1} parent=1 // pred_fallthru
      _
    %1080 = vsyncpa [#allocation3], 1
    %1081 = vsyncpa [#allocation6], 1
    %1082 = vsyncpa [#allocation9], 1
    %1083 = vsyncpa [#allocation4], 1

</llo_original>
